<compile_context>
chip_gen: v7x
topology: tpu7x:2x2x1
jax: 0.10.0
libtpu: 0.0.40
codegen_flags: <defaults>
</compile_context>

<pallas_src>
import jax
import jax.numpy as jnp
from jax.experimental import pallas as pl
from jax.experimental.pallas import tpu as pltpu


def decoder_kernel(x_ref, c_ref, w1a_ref, w1b_ref, b1_ref, w2_ref, b2_ref,
                   out_ref):
    # Linear(17, 128) on the implicit (x | c) concat: two small MXU dots
    # (K is padded to the MXU anyway, so this costs the same as one).
    h = jnp.dot(x_ref[...], w1a_ref[...], preferred_element_type=jnp.float32)
    h = h + jnp.dot(c_ref[...], w1b_ref[...], preferred_element_type=jnp.float32)
    h = jnp.maximum(h + b1_ref[...], 0.0)
    # ConvTranspose2d(8, 1, 2, stride=2) as a (128, 64) matmul whose columns are
    # already in row-major (8, 8) output-pixel order, + scalar bias (SMEM) + ReLU.
    y = jnp.dot(h, w2_ref[...], preferred_element_type=jnp.float32)
    out_ref[...] = jnp.maximum(y + b2_ref[0, 0], 0.0)


def prepare_decoder_params(params, latent_dims):
    """One-time (hoisted) preprocessing of the module parameters."""
    w1, b1, conv_w, conv_b = params
    w1 = w1.astype(jnp.float32)
    w1a = w1[:latent_dims]                              # (latent, 128)
    w1b = w1[latent_dims:]                              # (17 - latent, 128)
    b1_2d = b1.reshape(1, 128).astype(jnp.float32)

    # ConvTranspose2d(8, 1, 2, stride=2) as a (128, 64) matrix.
    #   row  index = flattened (c, i, j) of the unflattened (8, 4, 4) map
    #   col  index = flattened row-major (2i+p, 2j+q) output pixel
    # so W2[c*16 + i*4 + j, (2i+p)*8 + (2j+q)] = conv_w[c, 0, p, q].
    wc = conv_w[:, 0].astype(jnp.float32)               # (8, 2, 2)
    oh = jax.nn.one_hot(
        2 * jnp.arange(4)[:, None] + jnp.arange(2)[None, :], 8,
        dtype=jnp.float32)                              # oh[i, p, 2i+p] = 1
    w2 = jnp.einsum('cpq,ipr,jqs->cijrs', wc, oh, oh).reshape(128, 64)
    b2 = conv_b.reshape(1, 1).astype(jnp.float32)       # scalar -> SMEM
    return (w1a, w1b, b1_2d, w2, b2)


def cae_conv_decoder(x, c, prepared, *, tb_max=1024):
    """x: (B, latent), c: (B, 17-latent). Returns (B, 1, 8, 8) NCHW."""
    w1a, w1b, b1_2d, w2, b2 = prepared
    B, Dx = x.shape
    Dc = c.shape[1]
    assert Dx + Dc == 17
    x = x.astype(jnp.float32)
    c = c.astype(jnp.float32)

    # Batch tile: big enough to amortize per-step overhead, small enough to
    # double-buffer comfortably in VMEM on every generation (incl. v7x 64 MiB).
    TB = B if B < tb_max else tb_max
    num_tiles = pl.cdiv(B, TB)
    Bp = num_tiles * TB
    if Bp != B:
        x = jnp.pad(x, ((0, Bp - B), (0, 0)))
        c = jnp.pad(c, ((0, Bp - B), (0, 0)))

    flops = 2 * Bp * (Dx * 128 + Dc * 128 + 128 * 64)
    bytes_accessed = 4 * (Bp * (Dx + Dc + 64)
                          + (Dx + Dc) * 128 + 128 + 128 * 64 + 1)

    out_flat = pl.pallas_call(
        decoder_kernel,
        out_shape=jax.ShapeDtypeStruct((Bp, 64), jnp.float32),
        grid=(num_tiles,),
        in_specs=[
            pl.BlockSpec((TB, Dx), lambda b: (b, 0)),     # x   (batch-tiled)
            pl.BlockSpec((TB, Dc), lambda b: (b, 0)),     # c   (batch-tiled)
            pl.BlockSpec((Dx, 128), lambda b: (0, 0)),    # w1a (VMEM-resident)
            pl.BlockSpec((Dc, 128), lambda b: (0, 0)),    # w1b
            pl.BlockSpec((1, 128), lambda b: (0, 0)),     # b1
            pl.BlockSpec((128, 64), lambda b: (0, 0)),    # w2
            pl.BlockSpec(memory_space=pltpu.MemorySpace.SMEM),  # conv bias scalar
        ],
        out_specs=pl.BlockSpec((TB, 64), lambda b: (b, 0)),
        compiler_params=pltpu.CompilerParams(
            dimension_semantics=("parallel",)),
        cost_estimate=pl.CostEstimate(
            flops=flops, transcendentals=0, bytes_accessed=bytes_accessed),
    )(x, c, w1a, w1b, b1_2d, w2, b2)

    if Bp != B:
        out_flat = out_flat[:B]
    # Columns are already row-major (8, 8) pixels -> free reshape to NCHW.
    return out_flat.reshape(B, 1, 8, 8)


def reference(x, c, params):
    """Pure-JAX reference matching the PyTorch forward semantics."""
    w1, b1, conv_w, conv_b = params
    B = x.shape[0]
    xc = jnp.concatenate([x, c], axis=1)
    h = jnp.maximum(xc @ w1 + b1, 0.0)                 # Linear + ReLU
    h = h.reshape(B, 8, 4, 4)                          # Unflatten (NCHW)
    # ConvTranspose2d(8,1,2,stride=2):
    #   out[b,0,2i+p,2j+q] = sum_c h[b,c,i,j]*W[c,0,p,q] + bias
    g = jnp.einsum('bcij,cpq->bijpq', h, conv_w[:, 0]) + conv_b[0]
    out = g.transpose(0, 1, 3, 2, 4).reshape(B, 1, 8, 8)
    return jnp.maximum(out, 0.0)                       # final ReLU


def init_params(key):
    k1, k2, k3, k4 = jax.random.split(key, 4)
    w1 = jax.random.normal(k1, (17, 128), jnp.float32) * 0.1   # Linear (in, out)
    b1 = jax.random.normal(k2, (128,), jnp.float32) * 0.1
    conv_w = jax.random.normal(k3, (8, 1, 2, 2), jnp.float32) * 0.1  # ConvT2d
    conv_b = jax.random.normal(k4, (1,), jnp.float32) * 0.1
    return (w1, b1, conv_w, conv_b)


if __name__ == "__main__":
    key = jax.random.PRNGKey(0)
    kx, kc, kp = jax.random.split(key, 3)
    B, latent_dims, cond_dims = 2, 8, 9          # latent + cond = 17
    x = jax.random.normal(kx, (B, latent_dims), jnp.float32)
    c = jax.random.normal(kc, (B, cond_dims), jnp.float32)
    params = init_params(kp)

    prepared = prepare_decoder_params(params, latent_dims)   # hoisted, once
    out = cae_conv_decoder(x, c, prepared)
    out = jax.block_until_ready(out)

    ref = jax.block_until_ready(reference(x, c, params))
    assert out.shape == (B, 1, 8, 8), out.shape
    assert jnp.allclose(out, ref, atol=1e-5, rtol=1e-5), (
        float(jnp.max(jnp.abs(out - ref))))
    print("KERNEL_OK")
</pallas_src>

<mosaic_0001>
module attributes {stable_mosaic.version = 11 : i64} {
  func.func @decoder_kernel(%arg0: i32, %arg1: memref<2x8xf32, #tpu.memory_space<vmem>>, %arg2: memref<2x9xf32, #tpu.memory_space<vmem>>, %arg3: memref<8x128xf32, #tpu.memory_space<vmem>>, %arg4: memref<9x128xf32, #tpu.memory_space<vmem>>, %arg5: memref<1x128xf32, #tpu.memory_space<vmem>>, %arg6: memref<128x64xf32, #tpu.memory_space<vmem>>, %arg7: memref<1x1xf32, #tpu.memory_space<smem>>, %arg8: memref<2x64xf32, #tpu.memory_space<vmem>>) attributes {dimension_semantics = [#tpu.dimension_semantics<parallel>], iteration_bounds = array<i64: 1>, scalar_prefetch = 0 : i64, scratch_operands = 0 : i64, tpu.core_type = #tpu.core_type<tc>, window_params = [{transform_indices = @transform_0, window_bounds = array<i64: 2, 8>}, {transform_indices = @transform_1, window_bounds = array<i64: 2, 9>}, {pipeline_mode = #tpu.pipeline_mode<synchronous>, transform_indices = @transform_2, window_bounds = array<i64: 8, 128>}, {pipeline_mode = #tpu.pipeline_mode<synchronous>, transform_indices = @transform_3, window_bounds = array<i64: 9, 128>}, {pipeline_mode = #tpu.pipeline_mode<synchronous>, transform_indices = @transform_4, window_bounds = array<i64: 1, 128>}, {pipeline_mode = #tpu.pipeline_mode<synchronous>, transform_indices = @transform_5, window_bounds = array<i64: 128, 64>}, {transform_indices = @transform_6, window_bounds = array<i64: 1, 1>}, {transform_indices = @transform_7, window_bounds = array<i64: 2, 64>}]} {
    %c0 = arith.constant 0 : index
    %c0_0 = arith.constant 0 : index
    %0 = vector.load %arg1[%c0, %c0_0] : memref<2x8xf32, #tpu.memory_space<vmem>>, vector<2x8xf32>
    %c0_1 = arith.constant 0 : index
    %c0_2 = arith.constant 0 : index
    %1 = vector.load %arg3[%c0_1, %c0_2] : memref<8x128xf32, #tpu.memory_space<vmem>>, vector<8x128xf32>
    %cst = arith.constant dense<0.000000e+00> : vector<2x128xf32>
    %2 = tpu.matmul %0, %1, %cst {dimension_numbers = #tpu.dot_dimension_numbers<[1], [0], [0], [1], [0, 0, 1, 1], [], []>} : vector<2x8xf32>, vector<8x128xf32>, vector<2x128xf32> -> vector<2x128xf32>
    %c0_3 = arith.constant 0 : index
    %c0_4 = arith.constant 0 : index
    %3 = vector.load %arg2[%c0_3, %c0_4] : memref<2x9xf32, #tpu.memory_space<vmem>>, vector<2x9xf32>
    %c0_5 = arith.constant 0 : index
    %c0_6 = arith.constant 0 : index
    %4 = vector.load %arg4[%c0_5, %c0_6] : memref<9x128xf32, #tpu.memory_space<vmem>>, vector<9x128xf32>
    %cst_7 = arith.constant dense<0.000000e+00> : vector<2x128xf32>
    %5 = tpu.matmul %3, %4, %cst_7 {dimension_numbers = #tpu.dot_dimension_numbers<[1], [0], [0], [1], [0, 0, 1, 1], [], []>} : vector<2x9xf32>, vector<9x128xf32>, vector<2x128xf32> -> vector<2x128xf32>
    %6 = arith.addf %2, %5 : vector<2x128xf32>
    %c0_8 = arith.constant 0 : index
    %c0_9 = arith.constant 0 : index
    %7 = vector.load %arg5[%c0_8, %c0_9] : memref<1x128xf32, #tpu.memory_space<vmem>>, vector<1x128xf32>
    %8 = vector.broadcast %7 : vector<1x128xf32> to vector<2x128xf32>
    %9 = arith.addf %6, %8 : vector<2x128xf32>
    %cst_10 = arith.constant 0.000000e+00 : f32
    %10 = vector.broadcast %cst_10 : f32 to vector<2x128xf32>
    %11 = arith.maximumf %9, %10 : vector<2x128xf32>
    %c0_11 = arith.constant 0 : index
    %c0_12 = arith.constant 0 : index
    %12 = vector.load %arg6[%c0_11, %c0_12] : memref<128x64xf32, #tpu.memory_space<vmem>>, vector<128x64xf32>
    %cst_13 = arith.constant dense<0.000000e+00> : vector<2x64xf32>
    %13 = tpu.matmul %11, %12, %cst_13 {dimension_numbers = #tpu.dot_dimension_numbers<[1], [0], [0], [1], [0, 0, 1, 1], [], []>} : vector<2x128xf32>, vector<128x64xf32>, vector<2x64xf32> -> vector<2x64xf32>
    %c0_14 = arith.constant 0 : index
    %c0_15 = arith.constant 0 : index
    %14 = memref.load %arg7[%c0_14, %c0_15] : memref<1x1xf32, #tpu.memory_space<smem>>
    %15 = vector.broadcast %14 : f32 to vector<2x64xf32>
    %16 = arith.addf %13, %15 : vector<2x64xf32>
    %cst_16 = arith.constant 0.000000e+00 : f32
    %17 = vector.broadcast %cst_16 : f32 to vector<2x64xf32>
    %18 = arith.maximumf %16, %17 : vector<2x64xf32>
    %c0_17 = arith.constant 0 : index
    %c0_18 = arith.constant 0 : index
    %19 = vector.load %arg8[%c0_17, %c0_18] : memref<2x64xf32, #tpu.memory_space<vmem>>, vector<2x64xf32>
    tpu.vector_store %arg8[%c0_17, %c0_18], %18 {strides = array<i32>} : memref<2x64xf32, #tpu.memory_space<vmem>>, vector<2x64xf32>,
    return
  }
  func.func @transform_0(%arg0: i32) -> (i32, i32) {
    %c0_i32 = arith.constant 0 : i32
    %c0_i32_0 = arith.constant 0 : i32
    return %arg0, %c0_i32 : i32, i32
  }
  func.func @transform_1(%arg0: i32) -> (i32, i32) {
    %c0_i32 = arith.constant 0 : i32
    %c0_i32_0 = arith.constant 0 : i32
    return %arg0, %c0_i32 : i32, i32
  }
  func.func @transform_2(%arg0: i32) -> (i32, i32) {
    %c0_i32 = arith.constant 0 : i32
    %c0_i32_0 = arith.constant 0 : i32
    %c0_i32_1 = arith.constant 0 : i32
    return %c0_i32, %c0_i32_0 : i32, i32
  }
  func.func @transform_3(%arg0: i32) -> (i32, i32) {
    %c0_i32 = arith.constant 0 : i32
    %c0_i32_0 = arith.constant 0 : i32
    %c0_i32_1 = arith.constant 0 : i32
    return %c0_i32, %c0_i32_0 : i32, i32
  }
  func.func @transform_4(%arg0: i32) -> (i32, i32) {
    %c0_i32 = arith.constant 0 : i32
    %c0_i32_0 = arith.constant 0 : i32
    %c0_i32_1 = arith.constant 0 : i32
    return %c0_i32, %c0_i32_0 : i32, i32
  }
  func.func @transform_5(%arg0: i32) -> (i32, i32) {
    %c0_i32 = arith.constant 0 : i32
    %c0_i32_0 = arith.constant 0 : i32
    %c0_i32_1 = arith.constant 0 : i32
    return %c0_i32, %c0_i32_0 : i32, i32
  }
  func.func @transform_6(%arg0: i32) -> (i32, i32) {
    %c0_i32 = arith.constant 0 : i32
    %c0_i32_0 = arith.constant 0 : i32
    %c0_i32_1 = arith.constant 0 : i32
    return %c0_i32, %c0_i32_0 : i32, i32
  }
  func.func @transform_7(%arg0: i32) -> (i32, i32) {
    %c0_i32 = arith.constant 0 : i32
    %c0_i32_0 = arith.constant 0 : i32
    return %arg0, %c0_i32 : i32, i32
  }
}

</mosaic_0001>

<llo_original>
// kernel: tpu_custom_call.1
$region0: #{tpu_custom_call.1}
  #allocation0 [shape = 'u32[]', space=smem, size = 0x4, offset = 0x4, fixed_abs, tag = 'smem constant byte address 0x4 - core index']
  #allocation1 [shape = 'u32[144,128]{1,0:T(1,128)}', space=vmem, size = 0x12000, scoped, tag = 'internal scratch']
  #allocation2 [shape = 'f32[1,1]{1,0:T(1,128)S(6)}', space=smem, size = 0x200, scoped, tag = 'scoped memory for tpu_custom_call.1']
  %s0 = inlined_call_operand.vmem [shape: f32[2,8], index: 0, kind: input, shape index: {}]
  %s1 = inlined_call_operand.vmem [shape: f32[2,9], index: 1, kind: input, shape index: {}]
  %s2 = inlined_call_operand.vmem [shape: f32[8,128], index: 2, kind: input, shape index: {}]
  %s3 = inlined_call_operand.vmem [shape: f32[9,128], index: 3, kind: input, shape index: {}]
  %s4 = inlined_call_operand.vmem [shape: f32[1,128], index: 4, kind: input, shape index: {}]
  %s5 = inlined_call_operand.vmem [shape: f32[128,64], index: 5, kind: input, shape index: {}]
  %s6 = inlined_call_operand.<no memory space> [shape: f32[1,1], index: 6, kind: input, shape index: {}]
  %s7 = inlined_call_operand.hbm [shape: f32[2,64], index: 7, kind: output, shape index: {}]
  %s8 = sld [smem:[#allocation0]]
  $region38: #{tpu_custom_call.1} parent=0
    _
  %s10 = ssub.s32 1, %s8
  %s11 = scalar_select 0, %s10, %s8
  %12 = sst [smem:[#allocation2]] %s6
  $region1: #{tpu_custom_call.1} parent=0
    #allocation3 [shape = 'u8[1024]{0}', space=vmem, size = 0x400, scoped, tag = 'output window, operand 0, single buffered']
    #allocation4 [shape = 's32[1]{0}', space=sflag, size = 0x4, scoped, tag = 'scoped memory for tpu_custom_call.1']
    %13 = vsyncpa [#allocation4], 0
    // Predicated region
    $region2: #{tpu_custom_call.1} parent=1 // pred_check
      _
    $region3: #{tpu_custom_call.1} parent=1 // pred_check_branch
      %15 = sbr.rel (0) target = $region5
    $region4: #{tpu_custom_call.1} parent=1 // pred_region
      _
    $region5: #{tpu_custom_call.1} parent=1 // pred_fallthru
      _
    // Predicated region
    $region6: #{tpu_custom_call.1} parent=1 // pred_check
      _
    $region7: #{tpu_custom_call.1} parent=1 // pred_check_branch
      %17 = sbr.rel (0) target = $region9
    $region8: #{tpu_custom_call.1} parent=1 // pred_region
      _
    $region9: #{tpu_custom_call.1} parent=1 // pred_fallthru
      _
    // Predicated region
    $region10: #{tpu_custom_call.1} parent=1 // pred_check
      _
    $region11: #{tpu_custom_call.1} parent=1 // pred_check_branch
      %19 = sbr.rel (0) target = $region13
    $region12: #{tpu_custom_call.1} parent=1 // pred_region
      _
    $region13: #{tpu_custom_call.1} parent=1 // pred_fallthru
      _
    // Predicated region
    $region14: #{tpu_custom_call.1} parent=1 // pred_check
      _
    $region15: #{tpu_custom_call.1} parent=1 // pred_check_branch
      %21 = sbr.rel (0) target = $region17
    $region16: #{tpu_custom_call.1} parent=1 // pred_region
      _
    $region17: #{tpu_custom_call.1} parent=1 // pred_fallthru
      _
    // Predicated region
    $region18: #{tpu_custom_call.1} parent=1 // pred_check
      _
    $region19: #{tpu_custom_call.1} parent=1 // pred_check_branch
      %23 = sbr.rel (0) target = $region21
    $region20: #{tpu_custom_call.1} parent=1 // pred_region
      _
    $region21: #{tpu_custom_call.1} parent=1 // pred_fallthru
      _
    // Predicated region
    $region22: #{tpu_custom_call.1} parent=1 // pred_check
      _
    $region23: #{tpu_custom_call.1} parent=1 // pred_check_branch
      %25 = sbr.rel (0) target = $region25
    $region24: #{tpu_custom_call.1} parent=1 // pred_region
      _
    $region25: #{tpu_custom_call.1} parent=1 // pred_fallthru
      _
    // Predicated region
    $region26: #{tpu_custom_call.1} parent=1 // pred_check
      _
    $region27: #{tpu_custom_call.1} parent=1 // pred_check_branch
      %27 = sbr.rel (0) target = $region29
    $region28: #{tpu_custom_call.1} parent=1 // pred_region
      _
    $region29: #{tpu_custom_call.1} parent=1 // pred_fallthru
      _
    %v28 = vld [vmem:[%s0] sm:$0x3]
    %v29 = vld [vmem:[%s2] sm:$0xff]
    %v30 = vld [vmem:[%s1] sm:$0x3]
    %v31 = vld [vmem:[%s3] sm:$0xff]
    %v32 = vld [vmem:[%s3 + $0x8] sm:$0x1]
    %vm33 = vcmask 72704
    %v35 = vsel %vm33, %v30, 0
    %vm37 = vcmask 1040384
    %v39 = vsel %vm37, %v32, 0
    %41 = vmatprep.subr.mxu0 0.0
    %42 = vmatpush1.msra.mxu0 %v31
    %43 = vmatprep.subr.mxu0 0.0
    %44 = vmatpush1.msra.mxu0 %v39
    %45 = vmatprep.subr.mxu0 0.0
    %46 = vmatpush1.msra.mxu0 0.0
    %47 = vmatprep.subr.mxu0 0.0
    %48 = vmatpush1.msra.mxu0 0.0
    %49 = vmatprep.subr.mxu0 0.0
    %50 = vmatpush1.msra.mxu0 0.0
    %51 = vmatprep.subr.mxu0 0.0
    %52 = vmatpush1.msra.mxu0 0.0
    %53 = vmatprep.subr.mxu0 0.0
    %54 = vmatpush1.msra.mxu0 0.0
    %55 = vmatprep.subr.mxu0 0.0
    %56 = vmatpush1.msra.mxu0 0.0
    %57 = vmatprep.subr.mxu0 0.0
    %58 = vmatpush1.msra.mxu0 0.0
    %59 = vmatprep.subr.mxu0 0.0
    %60 = vmatpush1.msra.mxu0 0.0
    %61 = vmatprep.subr.mxu0 0.0
    %62 = vmatpush1.msra.mxu0 0.0
    %63 = vmatprep.subr.mxu0 0.0
    %64 = vmatpush1.msra.mxu0 0.0
    %65 = vmatprep.subr.mxu0 0.0
    %66 = vmatpush1.msra.mxu0 0.0
    %67 = vmatprep.subr.mxu0 0.0
    %68 = vmatpush1.msra.mxu0 0.0
    %69 = vmatprep.subr.mxu0 0.0
    %70 = vmatpush1.msra.mxu0 0.0
    %71 = vmatprep.subr.mxu0 0.0
    %72 = vmatpush1.msra.mxu0 0.0
    %73 = vmatprep.subr.mxu0 0.0
    %74 = vmatpush1.msra.mxu0 0.0
    %75 = vmatprep.subr.mxu0 0.0
    %76 = vmatpush1.msra.mxu0 0.0
    %77 = vmatprep.subr.mxu0 0.0
    %78 = vmatpush1.msra.mxu0 0.0
    %79 = vmatprep.subr.mxu0 0.0
    %80 = vmatpush1.msra.mxu0 0.0
    %81 = vmatprep.subr.mxu0 0.0
    %82 = vmatpush1.msra.mxu0 0.0
    %83 = vmatprep.subr.mxu0 0.0
    %84 = vmatpush1.msra.mxu0 0.0
    %85 = vmatprep.subr.mxu0 0.0
    %86 = vmatpush1.msra.mxu0 0.0
    %87 = vmatprep.subr.mxu0 0.0
    %88 = vmatpush1.msra.mxu0 0.0
    %89 = vmatprep.subr.mxu0 0.0
    %90 = vmatpush1.msra.mxu0 0.0
    %91 = vmatprep.subr.mxu0 0.0
    %92 = vmatpush1.msra.mxu0 0.0
    %93 = vmatprep.subr.mxu0 0.0
    %94 = vmatpush1.msra.mxu0 0.0
    %95 = vmatprep.subr.mxu0 0.0
    %96 = vmatpush1.msra.mxu0 0.0
    %97 = vmatprep.subr.mxu0 0.0
    %98 = vmatpush1.msra.mxu0 0.0
    %99 = vmatprep.subr.mxu0 0.0
    %100 = vmatpush1.msra.mxu0 0.0
    %101 = vmatprep.subr.mxu0 0.0
    %102 = vmatpush1.msra.mxu0 0.0
    %103 = vmatprep.subr.mxu0 0.0
    %104 = vmatpush1.msra.mxu0 0.0
    %105 = vmatprep.mubr.f32.mxu0 0.0
    %106 = vmatmul.mubr.f32.gmra.mrb[0].mxu0 %v35
    %v107 = vpop.f32.mrb[0].mxu0
    %v108 = vadd.f32 0.0, %v107
    %v109 = vpop.f32.mrb[0].mxu0
    %110 = vdwg.mxu0
    %vm111 = vcmask 64512
    %v113 = vsel %vm111, %v28, 0
    %115 = vmatprep.subr.mxu0 0.0
    %116 = vmatpush1.msra.mxu0 %v29
    %117 = vmatprep.subr.mxu0 0.0
    %118 = vmatpush1.msra.mxu0 0.0
    %119 = vmatprep.subr.mxu0 0.0
    %120 = vmatpush1.msra.mxu0 0.0
    %121 = vmatprep.subr.mxu0 0.0
    %122 = vmatpush1.msra.mxu0 0.0
    %123 = vmatprep.subr.mxu0 0.0
    %124 = vmatpush1.msra.mxu0 0.0
    %125 = vmatprep.subr.mxu0 0.0
    %126 = vmatpush1.msra.mxu0 0.0
    %127 = vmatprep.subr.mxu0 0.0
    %128 = vmatpush1.msra.mxu0 0.0
    %129 = vmatprep.subr.mxu0 0.0
    %130 = vmatpush1.msra.mxu0 0.0
    %131 = vmatprep.subr.mxu0 0.0
    %132 = vmatpush1.msra.mxu0 0.0
    %133 = vmatprep.subr.mxu0 0.0
    %134 = vmatpush1.msra.mxu0 0.0
    %135 = vmatprep.subr.mxu0 0.0
    %136 = vmatpush1.msra.mxu0 0.0
    %137 = vmatprep.subr.mxu0 0.0
    %138 = vmatpush1.msra.mxu0 0.0
    %139 = vmatprep.subr.mxu0 0.0
    %140 = vmatpush1.msra.mxu0 0.0
    %141 = vmatprep.subr.mxu0 0.0
    %142 = vmatpush1.msra.mxu0 0.0
    %143 = vmatprep.subr.mxu0 0.0
    %144 = vmatpush1.msra.mxu0 0.0
    %145 = vmatprep.subr.mxu0 0.0
    %146 = vmatpush1.msra.mxu0 0.0
    %147 = vmatprep.subr.mxu0 0.0
    %148 = vmatpush1.msra.mxu0 0.0
    %149 = vmatprep.subr.mxu0 0.0
    %150 = vmatpush1.msra.mxu0 0.0
    %151 = vmatprep.subr.mxu0 0.0
    %152 = vmatpush1.msra.mxu0 0.0
    %153 = vmatprep.subr.mxu0 0.0
    %154 = vmatpush1.msra.mxu0 0.0
    %155 = vmatprep.subr.mxu0 0.0
    %156 = vmatpush1.msra.mxu0 0.0
    %157 = vmatprep.subr.mxu0 0.0
    %158 = vmatpush1.msra.mxu0 0.0
    %159 = vmatprep.subr.mxu0 0.0
    %160 = vmatpush1.msra.mxu0 0.0
    %161 = vmatprep.subr.mxu0 0.0
    %162 = vmatpush1.msra.mxu0 0.0
    %163 = vmatprep.subr.mxu0 0.0
    %164 = vmatpush1.msra.mxu0 0.0
    %165 = vmatprep.subr.mxu0 0.0
    %166 = vmatpush1.msra.mxu0 0.0
    %167 = vmatprep.subr.mxu0 0.0
    %168 = vmatpush1.msra.mxu0 0.0
    %169 = vmatprep.subr.mxu0 0.0
    %170 = vmatpush1.msra.mxu0 0.0
    %171 = vmatprep.subr.mxu0 0.0
    %172 = vmatpush1.msra.mxu0 0.0
    %173 = vmatprep.subr.mxu0 0.0
    %174 = vmatpush1.msra.mxu0 0.0
    %175 = vmatprep.subr.mxu0 0.0
    %176 = vmatpush1.msra.mxu0 0.0
    %177 = vmatprep.subr.mxu0 0.0
    %178 = vmatpush1.msra.mxu0 0.0
    %179 = vmatprep.mubr.f32.mxu0 0.0
    %180 = vmatmul.mubr.f32.gmra.mrb[0].mxu0 %v113
    %v181 = vpop.f32.mrb[0].mxu0
    %v182 = vadd.f32 %v108, %v181
    %v183 = vpop.f32.mrb[0].mxu0
    %184 = vdwg.mxu0
    %v185 = vld [vmem:[%s4] sm:$0x1]
    %v187 = vlaneseq
    %v188 = vshrl.u32 %v187, 7
    %v189 = vsub.s32 0, %v188
    %v190 = vrot.slane %v185, %v189
    %v192 = vadd.f32 %v182, %v190
    %v193 = vmax.f32 %v192, 0.0
    %v194 = vld [vmem:[%s5] sm:$0xff]
    %v195 = vld [vmem:[%s5 + $0x8] sm:$0xff]
    %v196 = vld [vmem:[%s5 + $0x10] sm:$0xff]
    %v197 = vld [vmem:[%s5 + $0x18] sm:$0xff]
    %v198 = vld [vmem:[%s5 + $0x20] sm:$0xff]
    %v199 = vld [vmem:[%s5 + $0x28] sm:$0xff]
    %v200 = vld [vmem:[%s5 + $0x30] sm:$0xff]
    %v201 = vld [vmem:[%s5 + $0x38] sm:$0xff]
    %v202 = vld [vmem:[%s5 + $0x40] sm:$0xff]
    %v203 = vld [vmem:[%s5 + $0x48] sm:$0xff]
    %v204 = vld [vmem:[%s5 + $0x50] sm:$0xff]
    %v205 = vld [vmem:[%s5 + $0x58] sm:$0xff]
    %v206 = vld [vmem:[%s5 + $0x60] sm:$0xff]
    %v207 = vld [vmem:[%s5 + $0x68] sm:$0xff]
    %v208 = vld [vmem:[%s5 + $0x70] sm:$0xff]
    %v209 = vld [vmem:[%s5 + $0x78] sm:$0xff]
    %s210 = sld [smem:[#allocation2]]
    %v211 = vstv %s210
    %212 = vmatprep.subr.mxu0 0.0
    %213 = vmatpush1.msra.mxu0 %v194
    %214 = vmatprep.subr.mxu0 0.0
    %215 = vmatpush1.msra.mxu0 %v195
    %216 = vmatprep.subr.mxu0 0.0
    %217 = vmatpush1.msra.mxu0 %v196
    %218 = vmatprep.subr.mxu0 0.0
    %219 = vmatpush1.msra.mxu0 %v197
    %220 = vmatprep.subr.mxu0 0.0
    %221 = vmatpush1.msra.mxu0 %v198
    %222 = vmatprep.subr.mxu0 0.0
    %223 = vmatpush1.msra.mxu0 %v199
    %224 = vmatprep.subr.mxu0 0.0
    %225 = vmatpush1.msra.mxu0 %v200
    %226 = vmatprep.subr.mxu0 0.0
    %227 = vmatpush1.msra.mxu0 %v201
    %228 = vmatprep.subr.mxu0 0.0
    %229 = vmatpush1.msra.mxu0 %v202
    %230 = vmatprep.subr.mxu0 0.0
    %231 = vmatpush1.msra.mxu0 %v203
    %232 = vmatprep.subr.mxu0 0.0
    %233 = vmatpush1.msra.mxu0 %v204
    %234 = vmatprep.subr.mxu0 0.0
    %235 = vmatpush1.msra.mxu0 %v205
    %236 = vmatprep.subr.mxu0 0.0
    %237 = vmatpush1.msra.mxu0 %v206
    %238 = vmatprep.subr.mxu0 0.0
    %239 = vmatpush1.msra.mxu0 %v207
    %240 = vmatprep.subr.mxu0 0.0
    %241 = vmatpush1.msra.mxu0 %v208
    %242 = vmatprep.subr.mxu0 0.0
    %243 = vmatpush1.msra.mxu0 %v209
    %244 = vmatprep.subr.mxu0 0.0
    %245 = vmatpush1.msra.mxu0 0.0
    %246 = vmatprep.subr.mxu0 0.0
    %247 = vmatpush1.msra.mxu0 0.0
    %248 = vmatprep.subr.mxu0 0.0
    %249 = vmatpush1.msra.mxu0 0.0
    %250 = vmatprep.subr.mxu0 0.0
    %251 = vmatpush1.msra.mxu0 0.0
    %252 = vmatprep.subr.mxu0 0.0
    %253 = vmatpush1.msra.mxu0 0.0
    %254 = vmatprep.subr.mxu0 0.0
    %255 = vmatpush1.msra.mxu0 0.0
    %256 = vmatprep.subr.mxu0 0.0
    %257 = vmatpush1.msra.mxu0 0.0
    %258 = vmatprep.subr.mxu0 0.0
    %259 = vmatpush1.msra.mxu0 0.0
    %260 = vmatprep.subr.mxu0 0.0
    %261 = vmatpush1.msra.mxu0 0.0
    %262 = vmatprep.subr.mxu0 0.0
    %263 = vmatpush1.msra.mxu0 0.0
    %264 = vmatprep.subr.mxu0 0.0
    %265 = vmatpush1.msra.mxu0 0.0
    %266 = vmatprep.subr.mxu0 0.0
    %267 = vmatpush1.msra.mxu0 0.0
    %268 = vmatprep.subr.mxu0 0.0
    %269 = vmatpush1.msra.mxu0 0.0
    %270 = vmatprep.subr.mxu0 0.0
    %271 = vmatpush1.msra.mxu0 0.0
    %272 = vmatprep.subr.mxu0 0.0
    %273 = vmatpush1.msra.mxu0 0.0
    %274 = vmatprep.subr.mxu0 0.0
    %275 = vmatpush1.msra.mxu0 0.0
    %276 = vmatprep.mubr.f32.mxu0 0.0
    %277 = vmatmul.mubr.f32.gmra.mrb[0].mxu0 %v193
    %v278 = vpop.f32.mrb[0].mxu0
    %v279 = vadd.f32 %v211, %v278
    %v280 = vpop.f32.mrb[0].mxu0
    %281 = vdwg.mxu0
    %v282 = vmax.f32 %v279, 0.0
    %vm283 = vcmask 517120
    %284 = vst.msk [vmem:[#allocation3] sm:$0x3] %vm283, %v282
    // Predicated region
    $region30: #{tpu_custom_call.1} parent=1 // pred_check
      _
    $region31: #{tpu_custom_call.1} parent=1 // pred_check_branch
      %286 = sbr.rel (0) target = $region33
    $region32: #{tpu_custom_call.1} parent=1 // pred_region
      %s288 = ssub.s32 32, 32
      %289 = vsyncadd [#allocation4], %s288
      %s291 = sshll.u32 [#allocation3], 4
      %s292 = int_to_ptr.vmem [resolvable:$true] %s291
      %294 = dma.vmem_to_hbm [thread:$0]  %s292, 32, %s7, [#allocation4]
    $region33: #{tpu_custom_call.1} parent=1 // pred_fallthru
      _
    // Predicated region
    $region34: #{tpu_custom_call.1} parent=1 // pred_check
      _
    $region35: #{tpu_custom_call.1} parent=1 // pred_check_branch
      %296 = sbr.rel (0) target = $region37
    $region36: #{tpu_custom_call.1} parent=1 // pred_region
      %297 = dma.done [#allocation4], 32
    $region37: #{tpu_custom_call.1} parent=1 // pred_fallthru
      _
    %298 = vsyncpa [#allocation4], 1

</llo_original>
